<compile_context>
chip_gen: v6e
topology: v6e:2x2x1
jax: 0.10.0
libtpu: 0.0.40
codegen_flags: <defaults>
</compile_context>

<pallas_src>
import functools

import jax
import jax.numpy as jnp
from jax import lax
from jax.experimental import pallas as pl
from jax.experimental.pallas import tpu as pltpu


def _patch_merge_kernel(x_ref, wp_ref, cs_ref, bp_ref, o_ref, *,
                        eps, compute_dtype, c2):
    """One row-tile of fused 2x2x2 gather + LayerNorm + channel reduction.

    x_ref  : (2, th, 2, Wq, 2C) consolidated gather block (d_off, rows, h_off,
             cols, [w_off=0 | w_off=1] channels).
    wp_ref : (8C, Cout) gamma-folded reduction weight, compute_dtype.
    cs_ref : (1, Cout) f32 column sums of the gamma-folded weight.
    bp_ref : (1, Cout) f32 beta @ w.
    o_ref  : (th*Wq, Cout).
    """
    _, th, _, wq, _ = x_ref.shape
    rows = th * wq
    c8 = 4 * c2
    cout = o_ref.shape[-1]

    acc = jnp.zeros((rows, cout), jnp.float32)
    s1 = jnp.zeros((rows, 1), jnp.float32)
    s2 = jnp.zeros((rows, 1), jnp.float32)

    # Chunk order matches torch.cat([x0..x7], -1): chunk index = d*4 + h*2 + w.
    # Each (d, h) slice already carries its (w=0 | w=1) pair as contiguous 2C,
    # i.e. chunk k = d*2 + h maps to weight rows [k*2C, (k+1)*2C).
    for k, (d, h) in enumerate(((0, 0), (0, 1), (1, 0), (1, 1))):
        xk = x_ref[d, :, h, :, :].reshape(rows, c2)   # free when Wq % 8 == 0
        xf = xk.astype(jnp.float32)
        s1 = s1 + jnp.sum(xf, axis=-1, keepdims=True)
        s2 = s2 + jnp.sum(xf * xf, axis=-1, keepdims=True)
        acc = acc + jnp.dot(xk.astype(compute_dtype),
                            wp_ref[pl.ds(k * c2, c2), :],
                            preferred_element_type=jnp.float32)

    # One-pass LayerNorm statistics in f32 (inputs are roughly centered
    # activations; clamp guards the E[x^2]-mean^2 form).
    inv_n = 1.0 / c8
    mean = s1 * inv_n
    var = jnp.maximum(s2 * inv_n - mean * mean, 0.0)
    r = lax.rsqrt(var + eps)

    # Folded LN affine: scale/shift applied on the narrow (rows, Cout) result.
    out = r * acc - (r * mean) * cs_ref[...] + bp_ref[...]
    o_ref[...] = out.astype(o_ref.dtype)


def _vmem_plan():
    """Generation-aware (v5e/v6e: 128 MiB, v7x: 64 MiB) VMEM budget + cap."""
    cap = None
    try:
        cap = getattr(pltpu.get_tpu_info(), "vmem_capacity_bytes", None)
    except Exception:
        cap = None
    if not cap:
        cap = 128 * 2**20  # conservative assumption if the query is unavailable
    budget = min(int(0.45 * cap), 56 * 2**20)     # tile-selection budget
    limit_cap = min(int(0.75 * cap), 96 * 2**20)  # scoped-VMEM request ceiling
    return budget, limit_cap


def _choose_h_tile(BDh, Hh, Wq, c2, c_out, in_bytes, out_bytes, cdt_bytes,
                   target_rows, vmem_budget_bytes, min_grid_steps):
    """Largest H-tile (divisor of Hh) fitting the VMEM budget while keeping the
    grid long enough to feed both TensorCores and the DMA pipeline."""
    c8 = 4 * c2

    def est(th):
        rows = th * Wq
        return (2 * rows * c8 * in_bytes            # gather block, double-buffered
                + 2 * rows * c_out * out_bytes      # output block, double-buffered
                + 2 * c8 * c_out * cdt_bytes        # resident weight (conservative)
                + rows * (2 * c2 + c_out + 8) * 4   # in-kernel f32 temporaries
                + 8 * c_out * 4)                    # csum / b'

    cands = [th for th in range(1, Hh + 1)
             if Hh % th == 0 and ((th * Wq) % 8 == 0 or th == Hh)]
    fitting = [th for th in cands
               if th * Wq <= target_rows and est(th) <= vmem_budget_bytes]
    if not fitting:
        th = min(cands)
        return th, est(th)
    busy = [th for th in fitting if BDh * (Hh // th) >= min_grid_steps]
    th = max(busy) if busy else max(fitting)
    return th, est(th)


def patch_merging_pallas(x, w, gamma, beta, *, eps=1e-5, compute_dtype=None,
                         target_rows=4096, vmem_budget_bytes=None,
                         min_grid_steps=8):
    """Fused PatchMerging forward.

    x     : (B, D, H, W, C) channels-last; D must be even.
    w     : (8C, 2C)  — transpose of torch.nn.Linear(8C, 2C).weight.
    gamma, beta : (8C,) LayerNorm affine parameters.
    Returns (B, D//2, ceil(H/2), ceil(W/2), 2C) in x.dtype.
    """
    B, D, H, W, C = x.shape
    assert D % 2 == 0, "PatchMerging requires even depth D (as in the reference)."
    if (H % 2) or (W % 2):
        x = jnp.pad(x, ((0, 0), (0, 0), (0, H % 2), (0, W % 2), (0, 0)))
    Hp, Wp = x.shape[2], x.shape[3]
    Dh, Hh, Wq = D // 2, Hp // 2, Wp // 2
    C2, C8 = 2 * C, 8 * C
    Cout = w.shape[1]
    assert w.shape[0] == C8, "w must be (8C, 2C) (nn.Linear weight transposed)"

    if compute_dtype is None:
        compute_dtype = jnp.bfloat16 if x.dtype == jnp.bfloat16 else jnp.float32
    compute_dtype = jnp.dtype(compute_dtype)

    BDh = B * Dh
    # Free, contiguous re-view: (B*D/2, d_off, H'/2, h_off, W'/2, 2C).
    # The full 2x2x2 gather happens inside the pallas_call DMA, one block/step.
    x6 = x.reshape(BDh, 2, Hh, 2, Wq, C2)

    if vmem_budget_bytes is None:
        budget, limit_cap = _vmem_plan()
    else:
        budget = vmem_budget_bytes
        limit_cap = max(vmem_budget_bytes + (8 << 20), 32 * 2**20)

    in_bytes = jnp.dtype(x.dtype).itemsize
    th, est_bytes = _choose_h_tile(
        BDh, Hh, Wq, C2, Cout, in_bytes, in_bytes, compute_dtype.itemsize,
        target_rows, budget, min_grid_steps)
    rows = th * Wq

    # Fold LayerNorm affine + mean subtraction into the weight (prep in f32,
    # cast once): out = r*(x @ (gamma*w)) - (r*mean)*sum(gamma*w, 0) + beta @ w.
    gamma_f = gamma.astype(jnp.float32)
    beta_f = beta.astype(jnp.float32)
    w_f = w.astype(jnp.float32)
    wp = (gamma_f[:, None] * w_f).astype(compute_dtype)
    csum = jnp.sum(wp.astype(jnp.float32), axis=0, keepdims=True)  # matches MXU operand
    bprime = beta_f[None, :] @ w_f                                  # (1, Cout) f32

    kernel = functools.partial(_patch_merge_kernel, eps=eps,
                               compute_dtype=compute_dtype, c2=C2)
    vmem_limit_bytes = int(min(max(32 * 2**20, est_bytes + (4 << 20)), limit_cap))

    out = pl.pallas_call(
        kernel,
        out_shape=jax.ShapeDtypeStruct((BDh, Hh * Wq, Cout), x.dtype),
        grid_spec=pltpu.PrefetchScalarGridSpec(
            num_scalar_prefetch=0,
            grid=(BDh, Hh // th),
            in_specs=[
                # Single consolidated gather block: keeps the 2x2 offset axes
                # inside the block -> long contiguous DMA runs.
                pl.BlockSpec((pl.Squeezed(), 2, th, 2, Wq, C2),
                             lambda i, h: (i, 0, h, 0, 0, 0)),
                pl.BlockSpec((C8, Cout), lambda i, h: (0, 0)),   # gamma-folded w
                pl.BlockSpec((1, Cout), lambda i, h: (0, 0)),    # csum
                pl.BlockSpec((1, Cout), lambda i, h: (0, 0)),    # beta @ w
            ],
            out_specs=pl.BlockSpec((pl.Squeezed(), rows, Cout),
                                   lambda i, h: (i, h, 0)),
        ),
        compiler_params=pltpu.CompilerParams(
            dimension_semantics=("parallel", "parallel"),
            vmem_limit_bytes=vmem_limit_bytes),
    )(x6, wp, csum, bprime)

    return out.reshape(B, Dh, Hh, Wq, Cout)


def patch_merging_ref(x, w, gamma, beta, eps=1e-5):
    """Pure-JAX reference mirroring the PyTorch forward."""
    B, D, H, W, C = x.shape
    if (H % 2) or (W % 2):
        x = jnp.pad(x, ((0, 0), (0, 0), (0, H % 2), (0, W % 2), (0, 0)))
    x0 = x[:, 0::2, 0::2, 0::2, :]
    x1 = x[:, 0::2, 0::2, 1::2, :]
    x2 = x[:, 0::2, 1::2, 0::2, :]
    x3 = x[:, 0::2, 1::2, 1::2, :]
    x4 = x[:, 1::2, 0::2, 0::2, :]
    x5 = x[:, 1::2, 0::2, 1::2, :]
    x6 = x[:, 1::2, 1::2, 0::2, :]
    x7 = x[:, 1::2, 1::2, 1::2, :]
    xc = jnp.concatenate([x0, x1, x2, x3, x4, x5, x6, x7], axis=-1)
    xf = xc.astype(jnp.float32)
    mean = jnp.mean(xf, axis=-1, keepdims=True)
    var = jnp.mean((xf - mean) ** 2, axis=-1, keepdims=True)
    xn = (xf - mean) * lax.rsqrt(var + eps)
    y = xn * gamma.astype(jnp.float32) + beta.astype(jnp.float32)
    out = jnp.dot(y, w.astype(jnp.float32), precision=lax.Precision.HIGHEST)
    return out.astype(x.dtype)


if __name__ == "__main__":
    # dim (C) = 16 -> LayerNorm(128), Linear(128 -> 32, bias=False).
    # (Demo shape only: Cout=32 < 128 lanes means lane-masked stores; real
    #  Swin dims C>=48 are lane-dense. Do not benchmark with this shape.)
    B, D, H, W, C = 2, 4, 16, 16, 16

    key = jax.random.PRNGKey(0)
    kx, kw, kg, kb = jax.random.split(key, 4)

    x = jax.random.normal(kx, (B, D, H, W, C), dtype=jnp.float32)
    # nn.Linear(8C, 2C, bias=False).weight is (2C, 8C); the kernel takes (8C, 2C).
    w = (jax.random.normal(kw, (8 * C, 2 * C), dtype=jnp.float32)
         * (1.0 / jnp.sqrt(8.0 * C)))
    gamma = 1.0 + 0.01 * jax.random.normal(kg, (8 * C,), dtype=jnp.float32)
    beta = 0.01 * jax.random.normal(kb, (8 * C,), dtype=jnp.float32)

    # f32 activations: f32 MXU operands, tight tolerance.
    out = jax.block_until_ready(patch_merging_pallas(x, w, gamma, beta))
    ref = patch_merging_ref(x, w, gamma, beta)
    assert out.shape == (B, D // 2, H // 2, W // 2, 2 * C), out.shape
    assert jnp.allclose(out, ref, atol=2e-4, rtol=2e-4), (
        float(jnp.max(jnp.abs(out - ref))))

    # Odd H exercises the wrapper-side padding path (same kernel shapes).
    x_odd = x[:, :, :15]
    out_o = jax.block_until_ready(patch_merging_pallas(x_odd, w, gamma, beta))
    ref_o = patch_merging_ref(x_odd, w, gamma, beta)
    assert out_o.shape == (B, D // 2, 8, W // 2, 2 * C), out_o.shape
    assert jnp.allclose(out_o, ref_o, atol=2e-4, rtol=2e-4), (
        float(jnp.max(jnp.abs(out_o - ref_o))))

    # bf16 activations: bf16 MXU operands, f32 LayerNorm statistics.
    xb = x.astype(jnp.bfloat16)
    outb = jax.block_until_ready(patch_merging_pallas(xb, w, gamma, beta))
    refb = patch_merging_ref(xb, w, gamma, beta)
    assert outb.dtype == jnp.bfloat16
    assert jnp.allclose(outb.astype(jnp.float32), refb.astype(jnp.float32),
                        atol=1e-1, rtol=1e-1), (
        float(jnp.max(jnp.abs(outb.astype(jnp.float32)
                              - refb.astype(jnp.float32)))))

    print("KERNEL_OK")
</pallas_src>

<mosaic_0001>
module attributes {stable_mosaic.version = 11 : i64} {
  func.func @_patch_merge_kernel(%arg0: i32, %arg1: i32, %arg2: memref<1x2x4x2x8x32xf32, #tpu.memory_space<vmem>>, %arg3: memref<128x32xf32, #tpu.memory_space<vmem>>, %arg4: memref<1x32xf32, #tpu.memory_space<vmem>>, %arg5: memref<1x32xf32, #tpu.memory_space<vmem>>, %arg6: memref<1x32x32xf32, #tpu.memory_space<vmem>>) attributes {dimension_semantics = [#tpu.dimension_semantics<parallel>, #tpu.dimension_semantics<parallel>], iteration_bounds = array<i64: 4, 2>, scalar_prefetch = 0 : i64, scratch_operands = 0 : i64, tpu.core_type = #tpu.core_type<tc>, window_params = [{transform_indices = @transform_0, window_bounds = array<i64: 1, 2, 4, 2, 8, 32>}, {pipeline_mode = #tpu.pipeline_mode<synchronous>, transform_indices = @transform_1, window_bounds = array<i64: 128, 32>}, {pipeline_mode = #tpu.pipeline_mode<synchronous>, transform_indices = @transform_2, window_bounds = array<i64: 1, 32>}, {pipeline_mode = #tpu.pipeline_mode<synchronous>, transform_indices = @transform_3, window_bounds = array<i64: 1, 32>}, {transform_indices = @transform_4, window_bounds = array<i64: 1, 32, 32>}]} {
    %cst = arith.constant 0.000000e+00 : f32
    %0 = vector.broadcast %cst : f32 to vector<32x32xf32>
    %cst_0 = arith.constant 0.000000e+00 : f32
    %1 = vector.broadcast %cst_0 : f32 to vector<32x1xf32>
    %cst_1 = arith.constant 0.000000e+00 : f32
    %2 = vector.broadcast %cst_1 : f32 to vector<32x1xf32>
    %c0 = arith.constant 0 : index
    %c0_2 = arith.constant 0 : index
    %c0_3 = arith.constant 0 : index
    %c0_4 = arith.constant 0 : index
    %c0_5 = arith.constant 0 : index
    %c0_6 = arith.constant 0 : index
    %3 = vector.load %arg2[%c0, %c0_2, %c0_3, %c0_4, %c0_5, %c0_6] : memref<1x2x4x2x8x32xf32, #tpu.memory_space<vmem>>, vector<1x1x4x1x8x32xf32>
    %4 = vector.shape_cast %3 : vector<1x1x4x1x8x32xf32> to vector<4x8x32xf32>
    %5 = vector.shape_cast %4 : vector<4x8x32xf32> to vector<32x32xf32>
    %cst_7 = arith.constant dense<0.000000e+00> : vector<32xf32>
    %6 = vector.multi_reduction <add>, %5, %cst_7 [1] : vector<32x32xf32> to vector<32xf32>
    %7 = vector.shape_cast %6 : vector<32xf32> to vector<32x1xf32>
    %8 = arith.addf %1, %7 : vector<32x1xf32>
    %9 = arith.mulf %5, %5 : vector<32x32xf32>
    %cst_8 = arith.constant dense<0.000000e+00> : vector<32xf32>
    %10 = vector.multi_reduction <add>, %9, %cst_8 [1] : vector<32x32xf32> to vector<32xf32>
    %11 = vector.shape_cast %10 : vector<32xf32> to vector<32x1xf32>
    %12 = arith.addf %2, %11 : vector<32x1xf32>
    %c0_9 = arith.constant 0 : index
    %c0_10 = arith.constant 0 : index
    %13 = vector.load %arg3[%c0_9, %c0_10] : memref<128x32xf32, #tpu.memory_space<vmem>>, vector<32x32xf32>
    %cst_11 = arith.constant dense<0.000000e+00> : vector<32x32xf32>
    %14 = tpu.matmul %5, %13, %cst_11 {dimension_numbers = #tpu.dot_dimension_numbers<[1], [0], [0], [1], [0, 0, 1, 1], [], []>} : vector<32x32xf32>, vector<32x32xf32>, vector<32x32xf32> -> vector<32x32xf32>
    %15 = arith.addf %0, %14 : vector<32x32xf32>
    %c0_12 = arith.constant 0 : index
    %c0_13 = arith.constant 0 : index
    %c0_14 = arith.constant 0 : index
    %c1 = arith.constant 1 : index
    %c0_15 = arith.constant 0 : index
    %c0_16 = arith.constant 0 : index
    %16 = vector.load %arg2[%c0_12, %c0_13, %c0_14, %c1, %c0_15, %c0_16] : memref<1x2x4x2x8x32xf32, #tpu.memory_space<vmem>>, vector<1x1x4x1x8x32xf32>
    %17 = vector.shape_cast %16 : vector<1x1x4x1x8x32xf32> to vector<4x8x32xf32>
    %18 = vector.shape_cast %17 : vector<4x8x32xf32> to vector<32x32xf32>
    %cst_17 = arith.constant dense<0.000000e+00> : vector<32xf32>
    %19 = vector.multi_reduction <add>, %18, %cst_17 [1] : vector<32x32xf32> to vector<32xf32>
    %20 = vector.shape_cast %19 : vector<32xf32> to vector<32x1xf32>
    %21 = arith.addf %8, %20 : vector<32x1xf32>
    %22 = arith.mulf %18, %18 : vector<32x32xf32>
    %cst_18 = arith.constant dense<0.000000e+00> : vector<32xf32>
    %23 = vector.multi_reduction <add>, %22, %cst_18 [1] : vector<32x32xf32> to vector<32xf32>
    %24 = vector.shape_cast %23 : vector<32xf32> to vector<32x1xf32>
    %25 = arith.addf %12, %24 : vector<32x1xf32>
    %c32 = arith.constant 32 : index
    %c0_19 = arith.constant 0 : index
    %26 = vector.load %arg3[%c32, %c0_19] : memref<128x32xf32, #tpu.memory_space<vmem>>, vector<32x32xf32>
    %cst_20 = arith.constant dense<0.000000e+00> : vector<32x32xf32>
    %27 = tpu.matmul %18, %26, %cst_20 {dimension_numbers = #tpu.dot_dimension_numbers<[1], [0], [0], [1], [0, 0, 1, 1], [], []>} : vector<32x32xf32>, vector<32x32xf32>, vector<32x32xf32> -> vector<32x32xf32>
    %28 = arith.addf %15, %27 : vector<32x32xf32>
    %c0_21 = arith.constant 0 : index
    %c1_22 = arith.constant 1 : index
    %c0_23 = arith.constant 0 : index
    %c0_24 = arith.constant 0 : index
    %c0_25 = arith.constant 0 : index
    %c0_26 = arith.constant 0 : index
    %29 = vector.load %arg2[%c0_21, %c1_22, %c0_23, %c0_24, %c0_25, %c0_26] : memref<1x2x4x2x8x32xf32, #tpu.memory_space<vmem>>, vector<1x1x4x1x8x32xf32>
    %30 = vector.shape_cast %29 : vector<1x1x4x1x8x32xf32> to vector<4x8x32xf32>
    %31 = vector.shape_cast %30 : vector<4x8x32xf32> to vector<32x32xf32>
    %cst_27 = arith.constant dense<0.000000e+00> : vector<32xf32>
    %32 = vector.multi_reduction <add>, %31, %cst_27 [1] : vector<32x32xf32> to vector<32xf32>
    %33 = vector.shape_cast %32 : vector<32xf32> to vector<32x1xf32>
    %34 = arith.addf %21, %33 : vector<32x1xf32>
    %35 = arith.mulf %31, %31 : vector<32x32xf32>
    %cst_28 = arith.constant dense<0.000000e+00> : vector<32xf32>
    %36 = vector.multi_reduction <add>, %35, %cst_28 [1] : vector<32x32xf32> to vector<32xf32>
    %37 = vector.shape_cast %36 : vector<32xf32> to vector<32x1xf32>
    %38 = arith.addf %25, %37 : vector<32x1xf32>
    %c64 = arith.constant 64 : index
    %c0_29 = arith.constant 0 : index
    %39 = vector.load %arg3[%c64, %c0_29] : memref<128x32xf32, #tpu.memory_space<vmem>>, vector<32x32xf32>
    %cst_30 = arith.constant dense<0.000000e+00> : vector<32x32xf32>
    %40 = tpu.matmul %31, %39, %cst_30 {dimension_numbers = #tpu.dot_dimension_numbers<[1], [0], [0], [1], [0, 0, 1, 1], [], []>} : vector<32x32xf32>, vector<32x32xf32>, vector<32x32xf32> -> vector<32x32xf32>
    %41 = arith.addf %28, %40 : vector<32x32xf32>
    %c0_31 = arith.constant 0 : index
    %c1_32 = arith.constant 1 : index
    %c0_33 = arith.constant 0 : index
    %c1_34 = arith.constant 1 : index
    %c0_35 = arith.constant 0 : index
    %c0_36 = arith.constant 0 : index
    %42 = vector.load %arg2[%c0_31, %c1_32, %c0_33, %c1_34, %c0_35, %c0_36] : memref<1x2x4x2x8x32xf32, #tpu.memory_space<vmem>>, vector<1x1x4x1x8x32xf32>
    %43 = vector.shape_cast %42 : vector<1x1x4x1x8x32xf32> to vector<4x8x32xf32>
    %44 = vector.shape_cast %43 : vector<4x8x32xf32> to vector<32x32xf32>
    %cst_37 = arith.constant dense<0.000000e+00> : vector<32xf32>
    %45 = vector.multi_reduction <add>, %44, %cst_37 [1] : vector<32x32xf32> to vector<32xf32>
    %46 = vector.shape_cast %45 : vector<32xf32> to vector<32x1xf32>
    %47 = arith.addf %34, %46 : vector<32x1xf32>
    %48 = arith.mulf %44, %44 : vector<32x32xf32>
    %cst_38 = arith.constant dense<0.000000e+00> : vector<32xf32>
    %49 = vector.multi_reduction <add>, %48, %cst_38 [1] : vector<32x32xf32> to vector<32xf32>
    %50 = vector.shape_cast %49 : vector<32xf32> to vector<32x1xf32>
    %51 = arith.addf %38, %50 : vector<32x1xf32>
    %c96 = arith.constant 96 : index
    %c0_39 = arith.constant 0 : index
    %52 = vector.load %arg3[%c96, %c0_39] : memref<128x32xf32, #tpu.memory_space<vmem>>, vector<32x32xf32>
    %cst_40 = arith.constant dense<0.000000e+00> : vector<32x32xf32>
    %53 = tpu.matmul %44, %52, %cst_40 {dimension_numbers = #tpu.dot_dimension_numbers<[1], [0], [0], [1], [0, 0, 1, 1], [], []>} : vector<32x32xf32>, vector<32x32xf32>, vector<32x32xf32> -> vector<32x32xf32>
    %54 = arith.addf %41, %53 : vector<32x32xf32>
    %cst_41 = arith.constant 7.812500e-03 : f32
    %55 = vector.broadcast %cst_41 : f32 to vector<32x1xf32>
    %56 = arith.mulf %47, %55 : vector<32x1xf32>
    %cst_42 = arith.constant 7.812500e-03 : f32
    %57 = vector.broadcast %cst_42 : f32 to vector<32x1xf32>
    %58 = arith.mulf %51, %57 : vector<32x1xf32>
    %59 = arith.mulf %56, %56 : vector<32x1xf32>
    %60 = arith.subf %58, %59 : vector<32x1xf32>
    %cst_43 = arith.constant 0.000000e+00 : f32
    %61 = vector.broadcast %cst_43 : f32 to vector<32x1xf32>
    %62 = arith.maximumf %60, %61 : vector<32x1xf32>
    %cst_44 = arith.constant 9.99999974E-6 : f32
    %63 = vector.broadcast %cst_44 : f32 to vector<32x1xf32>
    %64 = arith.addf %62, %63 : vector<32x1xf32>
    %65 = math.rsqrt %64 : vector<32x1xf32>
    %66 = vector.broadcast %65 : vector<32x1xf32> to vector<32x32xf32>
    %67 = arith.mulf %66, %54 : vector<32x32xf32>
    %68 = arith.mulf %65, %56 : vector<32x1xf32>
    %c0_45 = arith.constant 0 : index
    %c0_46 = arith.constant 0 : index
    %69 = vector.load %arg4[%c0_45, %c0_46] : memref<1x32xf32, #tpu.memory_space<vmem>>, vector<1x32xf32>
    %70 = vector.broadcast %68 : vector<32x1xf32> to vector<32x32xf32>
    %71 = vector.broadcast %69 : vector<1x32xf32> to vector<32x32xf32>
    %72 = arith.mulf %70, %71 : vector<32x32xf32>
    %73 = arith.subf %67, %72 : vector<32x32xf32>
    %c0_47 = arith.constant 0 : index
    %c0_48 = arith.constant 0 : index
    %74 = vector.load %arg5[%c0_47, %c0_48] : memref<1x32xf32, #tpu.memory_space<vmem>>, vector<1x32xf32>
    %75 = vector.broadcast %74 : vector<1x32xf32> to vector<32x32xf32>
    %76 = arith.addf %73, %75 : vector<32x32xf32>
    %c0_49 = arith.constant 0 : index
    %c0_50 = arith.constant 0 : index
    %c0_51 = arith.constant 0 : index
    %77 = vector.load %arg6[%c0_49, %c0_50, %c0_51] : memref<1x32x32xf32, #tpu.memory_space<vmem>>, vector<1x32x32xf32>
    %78 = vector.shape_cast %77 : vector<1x32x32xf32> to vector<32x32xf32>
    %79 = vector.shape_cast %76 : vector<32x32xf32> to vector<1x32x32xf32>
    tpu.vector_store %arg6[%c0_49, %c0_50, %c0_51], %79 {strides = array<i32>} : memref<1x32x32xf32, #tpu.memory_space<vmem>>, vector<1x32x32xf32>,
    return
  }
  func.func @transform_0(%arg0: i32, %arg1: i32) -> (i32, i32, i32, i32, i32, i32) {
    %c0_i32 = arith.constant 0 : i32
    %c0_i32_0 = arith.constant 0 : i32
    %c0_i32_1 = arith.constant 0 : i32
    %c0_i32_2 = arith.constant 0 : i32
    %c0_i32_3 = arith.constant 0 : i32
    return %arg0, %c0_i32, %arg1, %c0_i32_0, %c0_i32_1, %c0_i32_2 : i32, i32, i32, i32, i32, i32
  }
  func.func @transform_1(%arg0: i32, %arg1: i32) -> (i32, i32) {
    %c0_i32 = arith.constant 0 : i32
    %c0_i32_0 = arith.constant 0 : i32
    %c0_i32_1 = arith.constant 0 : i32
    return %c0_i32, %c0_i32_0 : i32, i32
  }
  func.func @transform_2(%arg0: i32, %arg1: i32) -> (i32, i32) {
    %c0_i32 = arith.constant 0 : i32
    %c0_i32_0 = arith.constant 0 : i32
    %c0_i32_1 = arith.constant 0 : i32
    return %c0_i32, %c0_i32_0 : i32, i32
  }
  func.func @transform_3(%arg0: i32, %arg1: i32) -> (i32, i32) {
    %c0_i32 = arith.constant 0 : i32
    %c0_i32_0 = arith.constant 0 : i32
    %c0_i32_1 = arith.constant 0 : i32
    return %c0_i32, %c0_i32_0 : i32, i32
  }
  func.func @transform_4(%arg0: i32, %arg1: i32) -> (i32, i32, i32) {
    %c0_i32 = arith.constant 0 : i32
    %c0_i32_0 = arith.constant 0 : i32
    return %arg0, %arg1, %c0_i32 : i32, i32, i32
  }
}

</mosaic_0001>

<llo_original>
// kernel: tpu_custom_call.1
$region0: #{tpu_custom_call.1}
  #allocation0 [shape = 'u32[]', space=smem, size = 0x4, offset = 0x4, fixed_abs, tag = 'smem constant byte address 0x4 - core index']
  #allocation1 [shape = 'u32[144,128]{1,0:T(1,128)}', space=vmem, size = 0x12000, scoped, tag = 'internal scratch']
  #allocation4 [shape = 's32[]', space=sflag, size = 0x4, offset = 0, fixed_abs, tag = 'sflag constant byte address 0x0 - dummy sync flag']
  %s0 = inlined_call_operand.hbm [shape: f32[4,2,8,2,8,32], index: 0, kind: input, shape index: {}]
  %s1 = inlined_call_operand.vmem [shape: f32[128,32], index: 1, kind: input, shape index: {}]
  %s2 = inlined_call_operand.vmem [shape: f32[1,32], index: 2, kind: input, shape index: {}]
  %s3 = inlined_call_operand.vmem [shape: f32[1,32], index: 3, kind: input, shape index: {}]
  %s4 = inlined_call_operand.vmem [shape: f32[4,64,32], index: 4, kind: output, shape index: {}]
  %s5 = sld [smem:[#allocation0]]
  $region53: #{tpu_custom_call.1} parent=0
    _
  %s7 = ssub.s32 1, %s5
  %s8 = scalar_select 0, %s7, %s5
  $region1: #{tpu_custom_call.1} parent=0
    #allocation2 [shape = 'u8[131072]{0}', space=vmem, size = 0x20000, scoped, tag = 'input window, operand 0']
    #allocation3 [shape = 's32[2]{0}', space=sflag, size = 0x8, scoped, tag = 'scoped memory for tpu_custom_call.1']
    %9 = vsyncpa [#allocation3], 0
    %s10 = scalar_lea.sflag [#allocation3], 1
    %11 = vsyncpa %s10, 0
    loop: start=0, step=1, limit=10
    $region2: #{tpu_custom_call.1} parent=1 // loop_pre_header
      _
    $region3: #{tpu_custom_call.1} parent=1 // loop_header
      %s13 = sphi 0, %s17
      %p14 = scmp.ge.s32.totalorder %s13, 10
      %s20 = sphi 0, %s32
      %s21 = sphi 0, %s28
      %s22 = sphi 0, %s20
      %s23 = sphi 0, %s21
      %s24 = sphi 0, %s22
      %s25 = sphi 0, %s23
      %s37 = sphi 0, %s39
      %s40 = sphi 0, %s37
      %s41 = sphi 0, %s40
      %s57 = sphi 0, %s41
      %s61 = sphi 0, %s61
      %s63 = sphi 0, %s61
      %s64 = sphi 0, %s63
      %s78 = sphi 0, %s64
      %s82 = sphi 0, %s82
      %s84 = sphi 0, %s82
      %s85 = sphi 0, %s84
      %s99 = sphi 0, %s85
      %s103 = sphi 0, %s103
      %s105 = sphi 0, %s103
      %s106 = sphi 0, %s105
      %s120 = sphi 0, %s106
      %s128 = sphi 0, %s130
      %s131 = sphi 0, %s128
      %s132 = sphi 0, %s131
      %s148 = sphi 0, %s132
    $region4: #{tpu_custom_call.1} parent=1 // loop_header_branch
      %16 = sbr.rel (%p14) target = $region8
    $region5: #{tpu_custom_call.1} parent=1 // loop_body
      %s18 = ssub.s32 %s13, 1
      %s19 = ssub.s32 %s13, 2
      %s26 = sadd.s32 1, %s21
      %p27 = scmp.ge.s32.totalorder %s26, 2
      %s28 = scalar_select %p27, 0, %s26
      %s29 = sadd.s32 1, %s20
      %s30 = scalar_select %p27, %s29, %s20
      %p31 = scmp.ge.s32.totalorder %s30, 4
      %s32 = scalar_select %p31, 0, %s30
      %s33 = ssub.s32 %s20, %s32
      %s34 = ssub.s32 %s21, %s28
      %s35 = sor.u32 %s33, %s34
      %p36 = scmp.eq.s32.totalorder %s35, 0
      %s38 = sadd.s32 %s37, 1
      %s39 = scalar_select %p36, %s37, %s38
      %p42 = pneg %p36
      %p43 = scmp.eq.s32.totalorder %s13, 7
      %p44 = por %p42, %p43
      %p45 = scmp.ne.s32.totalorder %s37, %s40
      %p46 = scmp.eq.s32.totalorder %s13, 0
      %p47 = por %p45, %p46
      %p48 = scmp.ne.s32.totalorder %s37, %s40
      %p49 = scmp.eq.s32.totalorder %s18, 7
      %p50 = por %p48, %p49
      %p51 = scmp.ne.s32.totalorder %s40, %s41
      %p52 = scmp.eq.s32.totalorder %s18, 0
      %p53 = por %p51, %p52
      %p54 = scmp.ne.s32.totalorder %s40, %s41
      %p55 = scmp.eq.s32.totalorder %s19, 7
      %p56 = por %p54, %p55
      %p58 = scmp.ne.s32.totalorder %s41, %s57
      %p59 = scmp.eq.s32.totalorder %s19, 0
      %p60 = por %p58, %p59
      %s62 = sadd.s32 %s61, 1
      %p65 = scmp.eq.s32.totalorder %s13, 7
      %p66 = scmp.ne.s32.totalorder %s61, %s63
      %p67 = scmp.eq.s32.totalorder %s13, 0
      %p68 = por %p66, %p67
      %p69 = scmp.ne.s32.totalorder %s61, %s63
      %p70 = scmp.eq.s32.totalorder %s18, 7
      %p71 = por %p69, %p70
      %p72 = scmp.ne.s32.totalorder %s63, %s64
      %p73 = scmp.eq.s32.totalorder %s18, 0
      %p74 = por %p72, %p73
      %p75 = scmp.ne.s32.totalorder %s63, %s64
      %p76 = scmp.eq.s32.totalorder %s19, 7
      %p77 = por %p75, %p76
      %p79 = scmp.ne.s32.totalorder %s64, %s78
      %p80 = scmp.eq.s32.totalorder %s19, 0
      %p81 = por %p79, %p80
      %s83 = sadd.s32 %s82, 1
      %p86 = scmp.eq.s32.totalorder %s13, 7
      %p87 = scmp.ne.s32.totalorder %s82, %s84
      %p88 = scmp.eq.s32.totalorder %s13, 0
      %p89 = por %p87, %p88
      %p90 = scmp.ne.s32.totalorder %s82, %s84
      %p91 = scmp.eq.s32.totalorder %s18, 7
      %p92 = por %p90, %p91
      %p93 = scmp.ne.s32.totalorder %s84, %s85
      %p94 = scmp.eq.s32.totalorder %s18, 0
      %p95 = por %p93, %p94
      %p96 = scmp.ne.s32.totalorder %s84, %s85
      %p97 = scmp.eq.s32.totalorder %s19, 7
      %p98 = por %p96, %p97
      %p100 = scmp.ne.s32.totalorder %s85, %s99
      %p101 = scmp.eq.s32.totalorder %s19, 0
      %p102 = por %p100, %p101
      %s104 = sadd.s32 %s103, 1
      %p107 = scmp.eq.s32.totalorder %s13, 7
      %p108 = scmp.ne.s32.totalorder %s103, %s105
      %p109 = scmp.eq.s32.totalorder %s13, 0
      %p110 = por %p108, %p109
      %p111 = scmp.ne.s32.totalorder %s103, %s105
      %p112 = scmp.eq.s32.totalorder %s18, 7
      %p113 = por %p111, %p112
      %p114 = scmp.ne.s32.totalorder %s105, %s106
      %p115 = scmp.eq.s32.totalorder %s18, 0
      %p116 = por %p114, %p115
      %p117 = scmp.ne.s32.totalorder %s105, %s106
      %p118 = scmp.eq.s32.totalorder %s19, 7
      %p119 = por %p117, %p118
      %p121 = scmp.ne.s32.totalorder %s106, %s120
      %p122 = scmp.eq.s32.totalorder %s19, 0
      %p123 = por %p121, %p122
      %s124 = ssub.s32 %s20, %s32
      %s125 = ssub.s32 %s21, %s28
      %s126 = sor.u32 %s124, %s125
      %p127 = scmp.eq.s32.totalorder %s126, 0
      %s129 = sadd.s32 %s128, 1
      %s130 = scalar_select %p127, %s128, %s129
      %p133 = pneg %p127
      %p134 = scmp.eq.s32.totalorder %s13, 7
      %p135 = por %p133, %p134
      %p136 = scmp.ne.s32.totalorder %s128, %s131
      %p137 = scmp.eq.s32.totalorder %s13, 0
      %p138 = por %p136, %p137
      %p139 = scmp.ne.s32.totalorder %s128, %s131
      %p140 = scmp.eq.s32.totalorder %s18, 7
      %p141 = por %p139, %p140
      %p142 = scmp.ne.s32.totalorder %s131, %s132
      %p143 = scmp.eq.s32.totalorder %s18, 0
      %p144 = por %p142, %p143
      %p145 = scmp.ne.s32.totalorder %s131, %s132
      %p146 = scmp.eq.s32.totalorder %s19, 7
      %p147 = por %p145, %p146
      %p149 = scmp.ne.s32.totalorder %s132, %s148
      %p150 = scmp.eq.s32.totalorder %s19, 0
      %p151 = por %p149, %p150
      %p152 = scmp.le.s32.totalorder 1, %s13
      %p153 = scmp.lt.s32.totalorder %s13, 9
      %p154 = pnand %p152, %p153
      %p155 = pneg %p154
      // Predicated region
      $region9: #{tpu_custom_call.1} parent=5 // pred_check
        _
      $region10: #{tpu_custom_call.1} parent=5 // pred_check_branch
        %157 = sbr.rel (%p154) target = $region12
      $region11: #{tpu_custom_call.1} parent=5 // pred_region
        %s158 = ssub.s32 %s13, 1
        // Predicated region
        $region13: #{tpu_custom_call.1} parent=11 // pred_check
          %p159 = pneg %p74
        $region14: #{tpu_custom_call.1} parent=11 // pred_check_branch
          %161 = sbr.rel (%p159) target = $region16
        $region15: #{tpu_custom_call.1} parent=11 // pred_region
          _
        $region16: #{tpu_custom_call.1} parent=11 // pred_fallthru
          _
        // Predicated region
        $region17: #{tpu_custom_call.1} parent=11 // pred_check
          %p162 = pneg %p95
        $region18: #{tpu_custom_call.1} parent=11 // pred_check_branch
          %164 = sbr.rel (%p162) target = $region20
        $region19: #{tpu_custom_call.1} parent=11 // pred_region
          _
        $region20: #{tpu_custom_call.1} parent=11 // pred_fallthru
          _
        // Predicated region
        $region21: #{tpu_custom_call.1} parent=11 // pred_check
          %p165 = pneg %p116
        $region22: #{tpu_custom_call.1} parent=11 // pred_check_branch
          %167 = sbr.rel (%p165) target = $region24
        $region23: #{tpu_custom_call.1} parent=11 // pred_region
          _
        $region24: #{tpu_custom_call.1} parent=11 // pred_fallthru
          _
      $region12: #{tpu_custom_call.1} parent=5 // pred_fallthru
        _
      %p168 = scmp.lt.s32.totalorder %s13, 8
      // Predicated region
      $region25: #{tpu_custom_call.1} parent=5 // pred_check
        %p169 = pneg %p168
      $region26: #{tpu_custom_call.1} parent=5 // pred_check_branch
        %171 = sbr.rel (%p169) target = $region28
      $region27: #{tpu_custom_call.1} parent=5 // pred_region
        // Predicated region
        $region29: #{tpu_custom_call.1} parent=27 // pred_check
          %p172 = pneg %p47
        $region30: #{tpu_custom_call.1} parent=27 // pred_check_branch
          %174 = sbr.rel (%p172) target = $region32
        $region31: #{tpu_custom_call.1} parent=27 // pred_region
          #allocation5 [shape = 'u32[6]{0}', space=smem, size = 0x18, scoped, tag = 'DMA stride descriptor']
          %s175 = sand.u32 %s37, 1
          %s176 = scalar_lea.sflag [#allocation3], %s175
          %s177 = sand.u32 %s37, 1
          %s178 = smul.addr %s177, 128
          %s179 = scalar_lea.vmem [#allocation2], %s178
          %s180 = smul.u32 4, %s21
          %s182 = ssub.s32 2048, 2048
          %183 = vsyncadd %s176, %s182
          %s184 = smul.addr %s180, 2
          %s185 = smul.addr %s20, 32
          %s186 = sadd.s32 %s184, %s185
          %s187 = smul.addr %s186, 128
          %s188 = scalar_lea.hbm %s0, %s187
          %s190 = sshll.u32 1, 14
          %s191 = sxor.u32 4294967295, %s190
          %s193 = sld [smem:[#allocation0]]
          %s194 = sadd.s32 2, %s193
          %s196 = sshll.u32 7, 26
          %s197 = sxor.u32 4294967295, %s196
          %s198 = sand.u32 0, %s197
          %s199 = sshll.u32 %s194, 26
          %s200 = sor.u32 %s198, %s199
          %s201 = sshll.u32 %s179, 4
          %s202 = int_to_ptr.vmem [resolvable:$true] %s201
          %208 = sst [smem:[#allocation5]] 2048
          %s209 = scalar_lea.smem [#allocation5], 1
          %210 = sst [smem:[%s209]] 1024
          %s211 = scalar_lea.smem [#allocation5], 2
          %212 = sst [smem:[%s211]] 8
          %s213 = scalar_lea.smem [#allocation5], 3
          %214 = sst [smem:[%s213]] 128
          %s215 = scalar_lea.smem [#allocation5], 4
          %216 = sst [smem:[%s215]] 128
          %s217 = scalar_lea.smem [#allocation5], 5
          %218 = sst [smem:[%s217]] 8
          %220 = dma.general %s188, 2048, %s202, %s176, 131072, [#allocation5], %s200, 0
        $region32: #{tpu_custom_call.1} parent=27 // pred_fallthru
          _
      $region28: #{tpu_custom_call.1} parent=5 // pred_fallthru
        _
      %p221 = scmp.le.s32.totalorder 1, %s13
      %p222 = scmp.lt.s32.totalorder %s13, 9
      %p223 = pnand %p221, %p222
      %p224 = pneg %p223
      // Predicated region
      $region33: #{tpu_custom_call.1} parent=5 // pred_check
        _
      $region34: #{tpu_custom_call.1} parent=5 // pred_check_branch
        %226 = sbr.rel (%p223) target = $region36
      $region35: #{tpu_custom_call.1} parent=5 // pred_region
        %s227 = ssub.s32 %s13, 1
        %s228 = sand.u32 %s40, 1
        %s229 = scalar_lea.sflag [#allocation3], %s228
        %s230 = sand.u32 %s40, 1
        %s231 = smul.addr %s230, 128
        %s232 = scalar_lea.vmem [#allocation2], %s231
        // Predicated region
        $region37: #{tpu_custom_call.1} parent=35 // pred_check
          %p233 = pneg %p53
        $region38: #{tpu_custom_call.1} parent=35 // pred_check_branch
          %235 = sbr.rel (%p233) target = $region40
        $region39: #{tpu_custom_call.1} parent=35 // pred_region
          %236 = dma.done %s229, 2048
        $region40: #{tpu_custom_call.1} parent=35 // pred_fallthru
          _
        %s237 = sand.u32 %s40, 1
        %s238 = scalar_lea.sflag [#allocation3], %s237
        %s239 = sand.u32 %s40, 1
        %s240 = smul.addr %s239, 128
        %s241 = scalar_lea.vmem [#allocation2], %s240
        %p242 = pneg %p53
        %p243 = pneg %p50
        %p244 = pneg %p74
        %p245 = pneg %p71
        %p246 = pneg %p95
        %p247 = pneg %p92
        %p248 = pneg %p116
        %p249 = pneg %p113
        %p250 = pneg %p144
        %p251 = pneg %p141
        %s252 = smul.u32 4, %s23
        %p253 = scmp.lt.s32.totalorder %s22, 3
        %s254 = scalar_select %p253, %s22, 3
        %p255 = scmp.lt.s32.totalorder %s252, 7
        %s256 = scalar_select %p255, %s252, 7
        %s257 = smul.addr %s254, 8
        %s258 = sadd.s32 %s256, %s257
        %s259 = smul.addr %s258, 8
        %s260 = scalar_lea.vmem %s4, %s259
        %s261 = smul.u32 4, %s23
        %s262 = smul.u32 4, %s23
        %p263 = scmp.lt.s32.totalorder %s22, 3
        %s264 = scalar_select %p263, %s22, 3
        %p265 = scmp.lt.s32.totalorder %s262, 7
        %s266 = scalar_select %p265, %s262, 7
        %s267 = smul.addr %s264, 8
        %s268 = sadd.s32 %s266, %s267
        %s269 = smul.addr %s268, 8
        %s270 = scalar_lea.vmem %s4, %s269
        %s271 = smul.u32 4, %s23
        %v272 = vld [vmem:[%s232] sm:$0xff]
        %v273 = vld [vmem:[%s232 + $0x10] sm:$0xff]
        %v274 = vld [vmem:[%s232 + $0x20] sm:$0xff]
        %v275 = vld [vmem:[%s232 + $0x30] sm:$0xff]
        %vm276 = vcmask 261120
        %v277 = vsel %vm276, %v272, 0.0
        %278 = vadd.xlane.f32.xlu0 %v277
        %v279 = vpop.xlane.xlu0 %278
        %v280 = vsel %vm276, %v273, 0.0
        %281 = vadd.xlane.f32.xlu0 %v280
        %v282 = vpop.xlane.xlu0 %281
        %v283 = vsel %vm276, %v274, 0.0
        %284 = vadd.xlane.f32.xlu0 %v283
        %v285 = vpop.xlane.xlu0 %284
        %v286 = vsel %vm276, %v275, 0.0
        %287 = vadd.xlane.f32.xlu0 %v286
        %v288 = vpop.xlane.xlu0 %287
        %v289 = vadd.f32 %v279, 0.0
        %v290 = vadd.f32 %v282, 0.0
        %v291 = vadd.f32 %v285, 0.0
        %v292 = vadd.f32 %v288, 0.0
        %v293 = vmul.f32 %v272, %v272
        %v294 = vmul.f32 %v273, %v273
        %v295 = vmul.f32 %v274, %v274
        %v296 = vmul.f32 %v275, %v275
        %v297 = vsel %vm276, %v293, 0.0
        %298 = vadd.xlane.f32.xlu0 %v297
        %v299 = vpop.xlane.xlu0 %298
        %v300 = vsel %vm276, %v294, 0.0
        %301 = vadd.xlane.f32.xlu0 %v300
        %v302 = vpop.xlane.xlu0 %301
        %v303 = vsel %vm276, %v295, 0.0
        %304 = vadd.xlane.f32.xlu0 %v303
        %v305 = vpop.xlane.xlu0 %304
        %v306 = vsel %vm276, %v296, 0.0
        %307 = vadd.xlane.f32.xlu0 %v306
        %v308 = vpop.xlane.xlu0 %307
        %v309 = vadd.f32 %v299, 0.0
        %v310 = vadd.f32 %v302, 0.0
        %v311 = vadd.f32 %v305, 0.0
        %v312 = vadd.f32 %v308, 0.0
        %v313 = vld [vmem:[%s1] sm:$0xff]
        %v314 = vld [vmem:[%s1 + $0x8] sm:$0xff]
        %v315 = vld [vmem:[%s1 + $0x10] sm:$0xff]
        %v316 = vld [vmem:[%s1 + $0x18] sm:$0xff]
        %s317 = scalar_lea.vmem %s232, 8 [#allocation2]
        %v318 = vld [vmem:[%s317] sm:$0xff]
        %v319 = vld [vmem:[%s317 + $0x10] sm:$0xff]
        %v320 = vld [vmem:[%s317 + $0x20] sm:$0xff]
        %v321 = vld [vmem:[%s317 + $0x30] sm:$0xff]
        %v322 = vsel %vm276, %v318, 0.0
        %323 = vadd.xlane.f32.xlu0 %v322
        %v324 = vpop.xlane.xlu0 %323
        %v325 = vsel %vm276, %v319, 0.0
        %326 = vadd.xlane.f32.xlu0 %v325
        %v327 = vpop.xlane.xlu0 %326
        %v328 = vsel %vm276, %v320, 0.0
        %329 = vadd.xlane.f32.xlu0 %v328
        %v330 = vpop.xlane.xlu0 %329
        %v331 = vsel %vm276, %v321, 0.0
        %332 = vadd.xlane.f32.xlu0 %v331
        %v333 = vpop.xlane.xlu0 %332
        %v334 = vadd.f32 %v289, %v324
        %v335 = vadd.f32 %v290, %v327
        %v336 = vadd.f32 %v291, %v330
        %v337 = vadd.f32 %v292, %v333
        %v338 = vmul.f32 %v318, %v318
        %v339 = vmul.f32 %v319, %v319
        %v340 = vmul.f32 %v320, %v320
        %v341 = vmul.f32 %v321, %v321
        %v342 = vsel %vm276, %v338, 0.0
        %343 = vadd.xlane.f32.xlu0 %v342
        %v344 = vpop.xlane.xlu0 %343
        %v345 = vsel %vm276, %v339, 0.0
        %346 = vadd.xlane.f32.xlu0 %v345
        %v347 = vpop.xlane.xlu0 %346
        %v348 = vsel %vm276, %v340, 0.0
        %349 = vadd.xlane.f32.xlu0 %v348
        %v350 = vpop.xlane.xlu0 %349
        %v351 = vsel %vm276, %v341, 0.0
        %352 = vadd.xlane.f32.xlu0 %v351
        %v353 = vpop.xlane.xlu0 %352
        %v354 = vadd.f32 %v309, %v344
        %v355 = vadd.f32 %v310, %v347
        %v356 = vadd.f32 %v311, %v350
        %v357 = vadd.f32 %v312, %v353
        %v358 = vld [vmem:[%s1 + $0x20] sm:$0xff]
        %v359 = vld [vmem:[%s1 + $0x28] sm:$0xff]
        %v360 = vld [vmem:[%s1 + $0x30] sm:$0xff]
        %v361 = vld [vmem:[%s1 + $0x38] sm:$0xff]
        %v363 = vsel %vm276, %v318, 0
        %v366 = vsel %vm276, %v319, 0
        %v369 = vsel %vm276, %v320, 0
        %v372 = vsel %vm276, %v321, 0
        %374 = vmatprep.subr.mxu0 0.0
        %375 = vmatpush1.msra.mxu0 0.0
        %376 = vmatprep.subr.mxu0 0.0
        %377 = vmatpush1.msra.mxu0 0.0
        %378 = vmatprep.subr.mxu0 0.0
        %379 = vmatpush1.msra.mxu0 0.0
        %380 = vmatprep.subr.mxu0 0.0
        %381 = vmatpush1.msra.mxu0 0.0
        %382 = vmatprep.subr.mxu0 0.0
        %383 = vmatpush1.msra.mxu0 0.0
        %384 = vmatprep.subr.mxu0 0.0
        %385 = vmatpush1.msra.mxu0 0.0
        %386 = vmatprep.subr.mxu0 0.0
        %387 = vmatpush1.msra.mxu0 0.0
        %388 = vmatprep.subr.mxu0 0.0
        %389 = vmatpush1.msra.mxu0 0.0
        %390 = vmatprep.subr.mxu0 0.0
        %391 = vmatpush1.msra.mxu0 0.0
        %392 = vmatprep.subr.mxu0 0.0
        %393 = vmatpush1.msra.mxu0 0.0
        %394 = vmatprep.subr.mxu0 0.0
        %395 = vmatpush1.msra.mxu0 0.0
        %396 = vmatprep.subr.mxu0 0.0
        %397 = vmatpush1.msra.mxu0 0.0
        %398 = vmatprep.subr.mxu0 0.0
        %399 = vmatpush1.msra.mxu0 %v361
        %400 = vmatprep.subr.mxu0 0.0
        %401 = vmatpush1.msra.mxu0 %v360
        %402 = vmatprep.subr.mxu0 0.0
        %403 = vmatpush1.msra.mxu0 %v359
        %404 = vmatprep.subr.mxu0 0.0
        %405 = vmatpush1.msra.mxu0 %v358
        %406 = vmatprep.subr.mxu0 0.0
        %407 = vmatpush2.msra.mxu0 0.0
        %408 = vmatprep.subr.mxu0 0.0
        %409 = vmatpush2.msra.mxu0 0.0
        %410 = vmatprep.subr.mxu0 0.0
        %411 = vmatpush2.msra.mxu0 0.0
        %412 = vmatprep.subr.mxu0 0.0
        %413 = vmatpush2.msra.mxu0 0.0
        %414 = vmatprep.subr.mxu0 0.0
        %415 = vmatpush2.msra.mxu0 0.0
        %416 = vmatprep.subr.mxu0 0.0
        %417 = vmatpush2.msra.mxu0 0.0
        %418 = vmatprep.subr.mxu0 0.0
        %419 = vmatpush2.msra.mxu0 0.0
        %420 = vmatprep.subr.mxu0 0.0
        %421 = vmatpush2.msra.mxu0 0.0
        %422 = vmatprep.subr.mxu0 0.0
        %423 = vmatpush2.msra.mxu0 0.0
        %424 = vmatprep.subr.mxu0 0.0
        %425 = vmatpush2.msra.mxu0 0.0
        %426 = vmatprep.subr.mxu0 0.0
        %427 = vmatpush2.msra.mxu0 0.0
        %428 = vmatprep.subr.mxu0 0.0
        %429 = vmatpush2.msra.mxu0 0.0
        %430 = vmatprep.subr.mxu0 0.0
        %431 = vmatpush2.msra.mxu0 0.0
        %432 = vmatprep.subr.mxu0 0.0
        %433 = vmatpush2.msra.mxu0 0.0
        %434 = vmatprep.subr.mxu0 0.0
        %435 = vmatpush2.msra.mxu0 0.0
        %436 = vmatprep.subr.mxu0 0.0
        %437 = vmatpush2.msra.mxu0 0.0
        %438 = vmatprep.mubr.f32.mxu0 0.0
        %439 = vmatmul.mubr.f32.gmra.mxu0 %v363
        %v440 = vpop.f32.mrf.mxu0
        %v441 = vadd.f32 0.0, %v440
        %v442 = vpop.f32.mrf.mxu0
        %443 = vmatprep.mubr.f32.mxu0 0.0
        %444 = vmatmul.mubr.f32.gmra.mxu0 %v366
        %v445 = vpop.f32.mrf.mxu0
        %v446 = vadd.f32 0.0, %v445
        %v447 = vpop.f32.mrf.mxu0
        %448 = vmatprep.mubr.f32.mxu0 0.0
        %449 = vmatmul.mubr.f32.gmra.mxu0 %v369
        %v450 = vpop.f32.mrf.mxu0
        %v451 = vadd.f32 0.0, %v450
        %v452 = vpop.f32.mrf.mxu0
        %453 = vmatprep.mubr.f32.mxu0 0.0
        %454 = vmatmul.mubr.f32.gmra.mxu0 %v372
        %v455 = vpop.f32.mrf.mxu0
        %v456 = vadd.f32 0.0, %v455
        %v457 = vpop.f32.mrf.mxu0
        %458 = vdwg.mxu0
        %v460 = vsel %vm276, %v272, 0
        %v463 = vsel %vm276, %v273, 0
        %v466 = vsel %vm276, %v274, 0
        %v469 = vsel %vm276, %v275, 0
        %471 = vmatprep.subr.mxu0 0.0
        %472 = vmatpush1.msra.mxu0 0.0
        %473 = vmatprep.subr.mxu0 0.0
        %474 = vmatpush1.msra.mxu0 0.0
        %475 = vmatprep.subr.mxu0 0.0
        %476 = vmatpush1.msra.mxu0 0.0
        %477 = vmatprep.subr.mxu0 0.0
        %478 = vmatpush1.msra.mxu0 0.0
        %479 = vmatprep.subr.mxu0 0.0
        %480 = vmatpush1.msra.mxu0 0.0
        %481 = vmatprep.subr.mxu0 0.0
        %482 = vmatpush1.msra.mxu0 0.0
        %483 = vmatprep.subr.mxu0 0.0
        %484 = vmatpush1.msra.mxu0 0.0
        %485 = vmatprep.subr.mxu0 0.0
        %486 = vmatpush1.msra.mxu0 0.0
        %487 = vmatprep.subr.mxu0 0.0
        %488 = vmatpush1.msra.mxu0 0.0
        %489 = vmatprep.subr.mxu0 0.0
        %490 = vmatpush1.msra.mxu0 0.0
        %491 = vmatprep.subr.mxu0 0.0
        %492 = vmatpush1.msra.mxu0 0.0
        %493 = vmatprep.subr.mxu0 0.0
        %494 = vmatpush1.msra.mxu0 0.0
        %495 = vmatprep.subr.mxu0 0.0
        %496 = vmatpush1.msra.mxu0 %v316
        %497 = vmatprep.subr.mxu0 0.0
        %498 = vmatpush1.msra.mxu0 %v315
        %499 = vmatprep.subr.mxu0 0.0
        %500 = vmatpush1.msra.mxu0 %v314
        %501 = vmatprep.subr.mxu0 0.0
        %502 = vmatpush1.msra.mxu0 %v313
        %503 = vmatprep.subr.mxu0 0.0
        %504 = vmatpush2.msra.mxu0 0.0
        %505 = vmatprep.subr.mxu0 0.0
        %506 = vmatpush2.msra.mxu0 0.0
        %507 = vmatprep.subr.mxu0 0.0
        %508 = vmatpush2.msra.mxu0 0.0
        %509 = vmatprep.subr.mxu0 0.0
        %510 = vmatpush2.msra.mxu0 0.0
        %511 = vmatprep.subr.mxu0 0.0
        %512 = vmatpush2.msra.mxu0 0.0
        %513 = vmatprep.subr.mxu0 0.0
        %514 = vmatpush2.msra.mxu0 0.0
        %515 = vmatprep.subr.mxu0 0.0
        %516 = vmatpush2.msra.mxu0 0.0
        %517 = vmatprep.subr.mxu0 0.0
        %518 = vmatpush2.msra.mxu0 0.0
        %519 = vmatprep.subr.mxu0 0.0
        %520 = vmatpush2.msra.mxu0 0.0
        %521 = vmatprep.subr.mxu0 0.0
        %522 = vmatpush2.msra.mxu0 0.0
        %523 = vmatprep.subr.mxu0 0.0
        %524 = vmatpush2.msra.mxu0 0.0
        %525 = vmatprep.subr.mxu0 0.0
        %526 = vmatpush2.msra.mxu0 0.0
        %527 = vmatprep.subr.mxu0 0.0
        %528 = vmatpush2.msra.mxu0 0.0
        %529 = vmatprep.subr.mxu0 0.0
        %530 = vmatpush2.msra.mxu0 0.0
        %531 = vmatprep.subr.mxu0 0.0
        %532 = vmatpush2.msra.mxu0 0.0
        %533 = vmatprep.subr.mxu0 0.0
        %534 = vmatpush2.msra.mxu0 0.0
        %535 = vmatprep.mubr.f32.mxu0 0.0
        %536 = vmatmul.mubr.f32.gmra.mxu0 %v460
        %v537 = vpop.f32.mrf.mxu0
        %v538 = vadd.f32 %v441, %v537
        %v539 = vpop.f32.mrf.mxu0
        %540 = vmatprep.mubr.f32.mxu0 0.0
        %541 = vmatmul.mubr.f32.gmra.mxu0 %v463
        %v542 = vpop.f32.mrf.mxu0
        %v543 = vadd.f32 %v446, %v542
        %v544 = vpop.f32.mrf.mxu0
        %545 = vmatprep.mubr.f32.mxu0 0.0
        %546 = vmatmul.mubr.f32.gmra.mxu0 %v466
        %v547 = vpop.f32.mrf.mxu0
        %v548 = vadd.f32 %v451, %v547
        %v549 = vpop.f32.mrf.mxu0
        %550 = vmatprep.mubr.f32.mxu0 0.0
        %551 = vmatmul.mubr.f32.gmra.mxu0 %v469
        %v552 = vpop.f32.mrf.mxu0
        %v553 = vadd.f32 %v456, %v552
        %v554 = vpop.f32.mrf.mxu0
        %555 = vdwg.mxu0
        %s556 = scalar_lea.vmem %s232, 64 [#allocation2]
        %v557 = vld [vmem:[%s556] sm:$0xff]
        %v558 = vld [vmem:[%s556 + $0x10] sm:$0xff]
        %v559 = vld [vmem:[%s556 + $0x20] sm:$0xff]
        %v560 = vld [vmem:[%s556 + $0x30] sm:$0xff]
        %v561 = vsel %vm276, %v557, 0.0
        %562 = vadd.xlane.f32.xlu0 %v561
        %v563 = vpop.xlane.xlu0 %562
        %v564 = vsel %vm276, %v558, 0.0
        %565 = vadd.xlane.f32.xlu0 %v564
        %v566 = vpop.xlane.xlu0 %565
        %v567 = vsel %vm276, %v559, 0.0
        %568 = vadd.xlane.f32.xlu0 %v567
        %v569 = vpop.xlane.xlu0 %568
        %v570 = vsel %vm276, %v560, 0.0
        %571 = vadd.xlane.f32.xlu0 %v570
        %v572 = vpop.xlane.xlu0 %571
        %v573 = vadd.f32 %v334, %v563
        %v574 = vadd.f32 %v335, %v566
        %v575 = vadd.f32 %v336, %v569
        %v576 = vadd.f32 %v337, %v572
        %v577 = vmul.f32 %v557, %v557
        %v578 = vmul.f32 %v558, %v558
        %v579 = vmul.f32 %v559, %v559
        %v580 = vmul.f32 %v560, %v560
        %v581 = vsel %vm276, %v577, 0.0
        %582 = vadd.xlane.f32.xlu0 %v581
        %v583 = vpop.xlane.xlu0 %582
        %v584 = vsel %vm276, %v578, 0.0
        %585 = vadd.xlane.f32.xlu0 %v584
        %v586 = vpop.xlane.xlu0 %585
        %v587 = vsel %vm276, %v579, 0.0
        %588 = vadd.xlane.f32.xlu0 %v587
        %v589 = vpop.xlane.xlu0 %588
        %v590 = vsel %vm276, %v580, 0.0
        %591 = vadd.xlane.f32.xlu0 %v590
        %v592 = vpop.xlane.xlu0 %591
        %v593 = vadd.f32 %v354, %v583
        %v594 = vadd.f32 %v355, %v586
        %v595 = vadd.f32 %v356, %v589
        %v596 = vadd.f32 %v357, %v592
        %v597 = vld [vmem:[%s1 + $0x40] sm:$0xff]
        %v598 = vld [vmem:[%s1 + $0x48] sm:$0xff]
        %v599 = vld [vmem:[%s1 + $0x50] sm:$0xff]
        %v600 = vld [vmem:[%s1 + $0x58] sm:$0xff]
        %v602 = vsel %vm276, %v557, 0
        %v605 = vsel %vm276, %v558, 0
        %v608 = vsel %vm276, %v559, 0
        %v611 = vsel %vm276, %v560, 0
        %613 = vmatprep.subr.mxu0 0.0
        %614 = vmatpush1.msra.mxu0 0.0
        %615 = vmatprep.subr.mxu0 0.0
        %616 = vmatpush1.msra.mxu0 0.0
        %617 = vmatprep.subr.mxu0 0.0
        %618 = vmatpush1.msra.mxu0 0.0
        %619 = vmatprep.subr.mxu0 0.0
        %620 = vmatpush1.msra.mxu0 0.0
        %621 = vmatprep.subr.mxu0 0.0
        %622 = vmatpush1.msra.mxu0 0.0
        %623 = vmatprep.subr.mxu0 0.0
        %624 = vmatpush1.msra.mxu0 0.0
        %625 = vmatprep.subr.mxu0 0.0
        %626 = vmatpush1.msra.mxu0 0.0
        %627 = vmatprep.subr.mxu0 0.0
        %628 = vmatpush1.msra.mxu0 0.0
        %629 = vmatprep.subr.mxu0 0.0
        %630 = vmatpush1.msra.mxu0 0.0
        %631 = vmatprep.subr.mxu0 0.0
        %632 = vmatpush1.msra.mxu0 0.0
        %633 = vmatprep.subr.mxu0 0.0
        %634 = vmatpush1.msra.mxu0 0.0
        %635 = vmatprep.subr.mxu0 0.0
        %636 = vmatpush1.msra.mxu0 0.0
        %637 = vmatprep.subr.mxu0 0.0
        %638 = vmatpush1.msra.mxu0 %v600
        %639 = vmatprep.subr.mxu0 0.0
        %640 = vmatpush1.msra.mxu0 %v599
        %641 = vmatprep.subr.mxu0 0.0
        %642 = vmatpush1.msra.mxu0 %v598
        %643 = vmatprep.subr.mxu0 0.0
        %644 = vmatpush1.msra.mxu0 %v597
        %645 = vmatprep.subr.mxu0 0.0
        %646 = vmatpush2.msra.mxu0 0.0
        %647 = vmatprep.subr.mxu0 0.0
        %648 = vmatpush2.msra.mxu0 0.0
        %649 = vmatprep.subr.mxu0 0.0
        %650 = vmatpush2.msra.mxu0 0.0
        %651 = vmatprep.subr.mxu0 0.0
        %652 = vmatpush2.msra.mxu0 0.0
        %653 = vmatprep.subr.mxu0 0.0
        %654 = vmatpush2.msra.mxu0 0.0
        %655 = vmatprep.subr.mxu0 0.0
        %656 = vmatpush2.msra.mxu0 0.0
        %657 = vmatprep.subr.mxu0 0.0
        %658 = vmatpush2.msra.mxu0 0.0
        %659 = vmatprep.subr.mxu0 0.0
        %660 = vmatpush2.msra.mxu0 0.0
        %661 = vmatprep.subr.mxu0 0.0
        %662 = vmatpush2.msra.mxu0 0.0
        %663 = vmatprep.subr.mxu0 0.0
        %664 = vmatpush2.msra.mxu0 0.0
        %665 = vmatprep.subr.mxu0 0.0
        %666 = vmatpush2.msra.mxu0 0.0
        %667 = vmatprep.subr.mxu0 0.0
        %668 = vmatpush2.msra.mxu0 0.0
        %669 = vmatprep.subr.mxu0 0.0
        %670 = vmatpush2.msra.mxu0 0.0
        %671 = vmatprep.subr.mxu0 0.0
        %672 = vmatpush2.msra.mxu0 0.0
        %673 = vmatprep.subr.mxu0 0.0
        %674 = vmatpush2.msra.mxu0 0.0
        %675 = vmatprep.subr.mxu0 0.0
        %676 = vmatpush2.msra.mxu0 0.0
        %677 = vmatprep.mubr.f32.mxu0 0.0
        %678 = vmatmul.mubr.f32.gmra.mxu0 %v602
        %v679 = vpop.f32.mrf.mxu0
        %v680 = vadd.f32 0.0, %v679
        %v681 = vpop.f32.mrf.mxu0
        %682 = vmatprep.mubr.f32.mxu0 0.0
        %683 = vmatmul.mubr.f32.gmra.mxu0 %v605
        %v684 = vpop.f32.mrf.mxu0
        %v685 = vadd.f32 0.0, %v684
        %v686 = vpop.f32.mrf.mxu0
        %687 = vmatprep.mubr.f32.mxu0 0.0
        %688 = vmatmul.mubr.f32.gmra.mxu0 %v608
        %v689 = vpop.f32.mrf.mxu0
        %v690 = vadd.f32 0.0, %v689
        %v691 = vpop.f32.mrf.mxu0
        %692 = vmatprep.mubr.f32.mxu0 0.0
        %693 = vmatmul.mubr.f32.gmra.mxu0 %v611
        %v694 = vpop.f32.mrf.mxu0
        %v695 = vadd.f32 0.0, %v694
        %v696 = vpop.f32.mrf.mxu0
        %697 = vdwg.mxu0
        %v698 = vadd.f32 %v538, %v680
        %v699 = vadd.f32 %v543, %v685
        %v700 = vadd.f32 %v548, %v690
        %v701 = vadd.f32 %v553, %v695
        %s702 = scalar_lea.vmem %s232, 72 [#allocation2]
        %v703 = vld [vmem:[%s702] sm:$0xff]
        %v704 = vld [vmem:[%s702 + $0x10] sm:$0xff]
        %v705 = vld [vmem:[%s702 + $0x20] sm:$0xff]
        %v706 = vld [vmem:[%s702 + $0x30] sm:$0xff]
        %v707 = vsel %vm276, %v703, 0.0
        %708 = vadd.xlane.f32.xlu0 %v707
        %v709 = vpop.xlane.xlu0 %708
        %v710 = vsel %vm276, %v704, 0.0
        %711 = vadd.xlane.f32.xlu0 %v710
        %v712 = vpop.xlane.xlu0 %711
        %v713 = vsel %vm276, %v705, 0.0
        %714 = vadd.xlane.f32.xlu0 %v713
        %v715 = vpop.xlane.xlu0 %714
        %v716 = vsel %vm276, %v706, 0.0
        %717 = vadd.xlane.f32.xlu0 %v716
        %v718 = vpop.xlane.xlu0 %717
        %v719 = vadd.f32 %v573, %v709
        %v720 = vadd.f32 %v574, %v712
        %v721 = vadd.f32 %v575, %v715
        %v722 = vadd.f32 %v576, %v718
        %v723 = vmul.f32 %v703, %v703
        %v724 = vmul.f32 %v704, %v704
        %v725 = vmul.f32 %v705, %v705
        %v726 = vmul.f32 %v706, %v706
        %v727 = vsel %vm276, %v723, 0.0
        %728 = vadd.xlane.f32.xlu0 %v727
        %v729 = vpop.xlane.xlu0 %728
        %v730 = vsel %vm276, %v724, 0.0
        %731 = vadd.xlane.f32.xlu0 %v730
        %v732 = vpop.xlane.xlu0 %731
        %v733 = vsel %vm276, %v725, 0.0
        %734 = vadd.xlane.f32.xlu0 %v733
        %v735 = vpop.xlane.xlu0 %734
        %v736 = vsel %vm276, %v726, 0.0
        %737 = vadd.xlane.f32.xlu0 %v736
        %v738 = vpop.xlane.xlu0 %737
        %v739 = vadd.f32 %v593, %v729
        %v740 = vadd.f32 %v594, %v732
        %v741 = vadd.f32 %v595, %v735
        %v742 = vadd.f32 %v596, %v738
        %v743 = vld [vmem:[%s1 + $0x60] sm:$0xff]
        %v744 = vld [vmem:[%s1 + $0x68] sm:$0xff]
        %v745 = vld [vmem:[%s1 + $0x70] sm:$0xff]
        %v746 = vld [vmem:[%s1 + $0x78] sm:$0xff]
        %v748 = vsel %vm276, %v703, 0
        %v751 = vsel %vm276, %v704, 0
        %v754 = vsel %vm276, %v705, 0
        %v757 = vsel %vm276, %v706, 0
        %759 = vmatprep.subr.mxu0 0.0
        %760 = vmatpush1.msra.mxu0 0.0
        %761 = vmatprep.subr.mxu0 0.0
        %762 = vmatpush1.msra.mxu0 0.0
        %763 = vmatprep.subr.mxu0 0.0
        %764 = vmatpush1.msra.mxu0 0.0
        %765 = vmatprep.subr.mxu0 0.0
        %766 = vmatpush1.msra.mxu0 0.0
        %767 = vmatprep.subr.mxu0 0.0
        %768 = vmatpush1.msra.mxu0 0.0
        %769 = vmatprep.subr.mxu0 0.0
        %770 = vmatpush1.msra.mxu0 0.0
        %771 = vmatprep.subr.mxu0 0.0
        %772 = vmatpush1.msra.mxu0 0.0
        %773 = vmatprep.subr.mxu0 0.0
        %774 = vmatpush1.msra.mxu0 0.0
        %775 = vmatprep.subr.mxu0 0.0
        %776 = vmatpush1.msra.mxu0 0.0
        %777 = vmatprep.subr.mxu0 0.0
        %778 = vmatpush1.msra.mxu0 0.0
        %779 = vmatprep.subr.mxu0 0.0
        %780 = vmatpush1.msra.mxu0 0.0
        %781 = vmatprep.subr.mxu0 0.0
        %782 = vmatpush1.msra.mxu0 0.0
        %783 = vmatprep.subr.mxu0 0.0
        %784 = vmatpush1.msra.mxu0 %v746
        %785 = vmatprep.subr.mxu0 0.0
        %786 = vmatpush1.msra.mxu0 %v745
        %787 = vmatprep.subr.mxu0 0.0
        %788 = vmatpush1.msra.mxu0 %v744
        %789 = vmatprep.subr.mxu0 0.0
        %790 = vmatpush1.msra.mxu0 %v743
        %791 = vmatprep.subr.mxu0 0.0
        %792 = vmatpush2.msra.mxu0 0.0
        %793 = vmatprep.subr.mxu0 0.0
        %794 = vmatpush2.msra.mxu0 0.0
        %795 = vmatprep.subr.mxu0 0.0
        %796 = vmatpush2.msra.mxu0 0.0
        %797 = vmatprep.subr.mxu0 0.0
        %798 = vmatpush2.msra.mxu0 0.0
        %799 = vmatprep.subr.mxu0 0.0
        %800 = vmatpush2.msra.mxu0 0.0
        %801 = vmatprep.subr.mxu0 0.0
        %802 = vmatpush2.msra.mxu0 0.0
        %803 = vmatprep.subr.mxu0 0.0
        %804 = vmatpush2.msra.mxu0 0.0
        %805 = vmatprep.subr.mxu0 0.0
        %806 = vmatpush2.msra.mxu0 0.0
        %807 = vmatprep.subr.mxu0 0.0
        %808 = vmatpush2.msra.mxu0 0.0
        %809 = vmatprep.subr.mxu0 0.0
        %810 = vmatpush2.msra.mxu0 0.0
        %811 = vmatprep.subr.mxu0 0.0
        %812 = vmatpush2.msra.mxu0 0.0
        %813 = vmatprep.subr.mxu0 0.0
        %814 = vmatpush2.msra.mxu0 0.0
        %815 = vmatprep.subr.mxu0 0.0
        %816 = vmatpush2.msra.mxu0 0.0
        %817 = vmatprep.subr.mxu0 0.0
        %818 = vmatpush2.msra.mxu0 0.0
        %819 = vmatprep.subr.mxu0 0.0
        %820 = vmatpush2.msra.mxu0 0.0
        %821 = vmatprep.subr.mxu0 0.0
        %822 = vmatpush2.msra.mxu0 0.0
        %823 = vmatprep.mubr.f32.mxu0 0.0
        %824 = vmatmul.mubr.f32.gmra.mxu0 %v748
        %v825 = vpop.f32.mrf.mxu0
        %v826 = vadd.f32 0.0, %v825
        %v827 = vpop.f32.mrf.mxu0
        %828 = vmatprep.mubr.f32.mxu0 0.0
        %829 = vmatmul.mubr.f32.gmra.mxu0 %v751
        %v830 = vpop.f32.mrf.mxu0
        %v831 = vadd.f32 0.0, %v830
        %v832 = vpop.f32.mrf.mxu0
        %833 = vmatprep.mubr.f32.mxu0 0.0
        %834 = vmatmul.mubr.f32.gmra.mxu0 %v754
        %v835 = vpop.f32.mrf.mxu0
        %v836 = vadd.f32 0.0, %v835
        %v837 = vpop.f32.mrf.mxu0
        %838 = vmatprep.mubr.f32.mxu0 0.0
        %839 = vmatmul.mubr.f32.gmra.mxu0 %v757
        %v840 = vpop.f32.mrf.mxu0
        %v841 = vadd.f32 0.0, %v840
        %v842 = vpop.f32.mrf.mxu0
        %843 = vdwg.mxu0
        %v844 = vadd.f32 %v698, %v826
        %v845 = vadd.f32 %v699, %v831
        %v846 = vadd.f32 %v700, %v836
        %v847 = vadd.f32 %v701, %v841
        %v848 = vmul.f32 %v719, 0.0078125
        %v849 = vmul.f32 %v720, 0.0078125
        %v850 = vmul.f32 %v721, 0.0078125
        %v851 = vmul.f32 %v722, 0.0078125
        %v852 = vmul.f32 %v739, 0.0078125
        %v853 = vmul.f32 %v740, 0.0078125
        %v854 = vmul.f32 %v741, 0.0078125
        %v855 = vmul.f32 %v742, 0.0078125
        %v856 = vmul.f32 %v848, %v848
        %v857 = vmul.f32 %v849, %v849
        %v858 = vmul.f32 %v850, %v850
        %v859 = vmul.f32 %v851, %v851
        %v860 = vsub.f32 %v852, %v856
        %v861 = vsub.f32 %v853, %v857
        %v862 = vsub.f32 %v854, %v858
        %v863 = vsub.f32 %v855, %v859
        %v864 = vmax.f32 %v860, 0.0
        %v865 = vmax.f32 %v861, 0.0
        %v866 = vmax.f32 %v862, 0.0
        %v867 = vmax.f32 %v863, 0.0
        %v868 = vadd.f32 %v864, 1e-05
        %v869 = vadd.f32 %v865, 1e-05
        %v870 = vadd.f32 %v866, 1e-05
        %v871 = vadd.f32 %v867, 1e-05
        %v872 = vrsqrt.pop %v868
        %v873 = vrsqrt.pop %v869
        %v874 = vrsqrt.pop %v870
        %v875 = vrsqrt.pop %v871
        %v876 = vmul.f32 %v872, %v844
        %v877 = vmul.f32 %v873, %v845
        %v878 = vmul.f32 %v874, %v846
        %v879 = vmul.f32 %v875, %v847
        %v880 = vmul.f32 %v872, %v848
        %v881 = vmul.f32 %v873, %v849
        %v882 = vmul.f32 %v874, %v850
        %v883 = vmul.f32 %v875, %v851
        %v884 = vld [vmem:[%s2] sm:$0x1]
        %v886 = vlaneseq
        %v887 = vshrl.u32 %v886, 7
        %v888 = vsub.s32 0, %v887
        %v889 = vrot.slane %v884, %v888
        %v891 = vmul.f32 %v880, %v889
        %v892 = vmul.f32 %v881, %v889
        %v893 = vmul.f32 %v882, %v889
        %v894 = vmul.f32 %v883, %v889
        %v895 = vsub.f32 %v876, %v891
        %v896 = vsub.f32 %v877, %v892
        %v897 = vsub.f32 %v878, %v893
        %v898 = vsub.f32 %v879, %v894
        %v899 = vld [vmem:[%s3] sm:$0x1]
        %v901 = vlaneseq
        %v902 = vshrl.u32 %v901, 7
        %v903 = vsub.s32 0, %v902
        %v904 = vrot.slane %v899, %v903
        %v906 = vadd.f32 %v895, %v904
        %v907 = vadd.f32 %v896, %v904
        %v908 = vadd.f32 %v897, %v904
        %v909 = vadd.f32 %v898, %v904
        %910 = vst.msk [vmem:[%s270] sm:$0xff] %vm276, %v906
        %911 = vst.msk [vmem:[%s270 + $0x8] sm:$0xff] %vm276, %v907
        %912 = vst.msk [vmem:[%s270 + $0x10] sm:$0xff] %vm276, %v908
        %913 = vst.msk [vmem:[%s270 + $0x18] sm:$0xff] %vm276, %v909
        %s914 = smul.u32 4, %s23
        %p915 = scmp.lt.s32.totalorder %s22, 3
        %s916 = scalar_select %p915, %s22, 3
        %p917 = scmp.lt.s32.totalorder %s914, 7
        %s918 = scalar_select %p917, %s914, 7
        %s919 = smul.addr %s916, 8
        %s920 = sadd.s32 %s918, %s919
        %s921 = smul.addr %s920, 8
        %s922 = scalar_lea.vmem %s4, %s921
        // Predicated region
        $region41: #{tpu_custom_call.1} parent=35 // pred_check
          %p923 = pneg %p141
        $region42: #{tpu_custom_call.1} parent=35 // pred_check_branch
          %925 = sbr.rel (%p923) target = $region44
        $region43: #{tpu_custom_call.1} parent=35 // pred_region
          %s926 = smul.u32 4, %s23
        $region44: #{tpu_custom_call.1} parent=35 // pred_fallthru
          _
      $region36: #{tpu_custom_call.1} parent=5 // pred_fallthru
        _
      %p927 = scmp.le.s32.totalorder 2, %s13
      // Predicated region
      $region45: #{tpu_custom_call.1} parent=5 // pred_check
        %p928 = pneg %p927
      $region46: #{tpu_custom_call.1} parent=5 // pred_check_branch
        %930 = sbr.rel (%p928) target = $region48
      $region47: #{tpu_custom_call.1} parent=5 // pred_region
        %s931 = ssub.s32 %s13, 2
        // Predicated region
        $region49: #{tpu_custom_call.1} parent=47 // pred_check
          %p932 = pneg %p147
        $region50: #{tpu_custom_call.1} parent=47 // pred_check_branch
          %934 = sbr.rel (%p932) target = $region52
        $region51: #{tpu_custom_call.1} parent=47 // pred_region
          %s935 = smul.u32 4, %s25
          %p936 = scmp.lt.s32.totalorder %s24, 3
          %s937 = scalar_select %p936, %s24, 3
          %p938 = scmp.lt.s32.totalorder %s935, 7
          %s939 = scalar_select %p938, %s935, 7
          %s940 = smul.addr %s937, 8
          %s941 = sadd.s32 %s939, %s940
          %s942 = smul.addr %s941, 8
          %s943 = scalar_lea.vmem %s4, %s942
        $region52: #{tpu_custom_call.1} parent=47 // pred_fallthru
          _
      $region48: #{tpu_custom_call.1} parent=5 // pred_fallthru
        _
    $region6: #{tpu_custom_call.1} parent=1 // loop_footer
      %s17 = sadd.s32 1, %s13
    $region7: #{tpu_custom_call.1} parent=1 // loop_footer_branch
      %12 = sbr.rel target = $region3
    $region8: #{tpu_custom_call.1} parent=1 // loop_exit
      _
    %944 = vsyncpa [#allocation3], 1
    %s945 = scalar_lea.sflag [#allocation3], 1
    %946 = vsyncpa %s945, 1

</llo_original>
